<compile_context>
chip_gen: v7x
topology: tpu7x:2x2x1
jax: 0.10.0
libtpu: 0.0.40
codegen_flags: <defaults>
</compile_context>

<pallas_src>
import jax
import jax.numpy as jnp
from jax.experimental import pallas as pl
from jax.experimental.pallas import tpu as pltpu

EPS = 1e-5          # BatchNorm1d default eps
NEG_SLOPE = 0.01    # LeakyReLU default negative_slope


def _round_up(x, m):
    return (x + m - 1) // m * m


def _vmem_limit_bytes():
    """~75% of physical VMEM (96 MiB v5e/v6e, 48 MiB v7x); safe 48 MiB fallback."""
    try:
        cap = pltpu.get_tpu_info().vmem_capacity_bytes
    except Exception:
        cap = 64 * 1024 * 1024
    return int(cap * 3 // 4)


# ----------------------------- pass 1 kernels -----------------------------

def _make_conv_stats_kernel_packed(tile_l, l_out):
    """Conv via a single tap-packed MXU matmul + bias; per-batch partial BN stats."""

    def kernel(xp_ref, w_ref, b_ref, y_ref, sum_ref, ssq_ref):
        l = pl.program_id(1)
        # (TILE_L, K_pad) bf16 @ (K_pad, C_out_pad) bf16 -> f32 accumulation on the MXU.
        acc = jnp.dot(xp_ref[0], w_ref[...], preferred_element_type=jnp.float32)
        y = acc + b_ref[...]                                   # (TILE_L, C_out_pad) f32

        # Mask padded output rows out of the BN statistics.
        row = jax.lax.broadcasted_iota(jnp.int32, (tile_l, 1), 0) + l * tile_l
        y_valid = jnp.where(row < l_out, y, 0.0)

        @pl.when(l == 0)
        def _():
            sum_ref[...] = jnp.zeros_like(sum_ref)
            ssq_ref[...] = jnp.zeros_like(ssq_ref)

        sum_ref[...] += jnp.sum(y_valid, axis=0, keepdims=True)[None]
        ssq_ref[...] += jnp.sum(y_valid * y_valid, axis=0, keepdims=True)[None]

        y_ref[...] = y.astype(y_ref.dtype)[None]               # bf16 pre-BN activations

    return kernel


def _make_conv_stats_kernel_taps(k, tile_l, l_out, c_out_pad):
    """Conv as k shifted matmuls, each tap read as a ref view; per-batch partial BN stats."""

    def kernel(x_ref, w_ref, b_ref, y_ref, sum_ref, ssq_ref):
        l = pl.program_id(1)
        base = pl.multiple_of(l * tile_l, tile_l)
        acc = jnp.zeros((tile_l, c_out_pad), jnp.float32)
        for kk in range(k):                                    # small static unroll over taps
            xk = x_ref[0, pl.ds(base + kk, tile_l), :]         # ref-view read (no slab copy)
            acc = acc + jnp.dot(xk, w_ref[kk], preferred_element_type=jnp.float32)
        y = acc + b_ref[...]

        row = jax.lax.broadcasted_iota(jnp.int32, (tile_l, 1), 0) + l * tile_l
        y_valid = jnp.where(row < l_out, y, 0.0)

        @pl.when(l == 0)
        def _():
            sum_ref[...] = jnp.zeros_like(sum_ref)
            ssq_ref[...] = jnp.zeros_like(ssq_ref)

        sum_ref[...] += jnp.sum(y_valid, axis=0, keepdims=True)[None]
        ssq_ref[...] += jnp.sum(y_valid * y_valid, axis=0, keepdims=True)[None]

        y_ref[...] = y.astype(y_ref.dtype)[None]

    return kernel


# ----------------------------- pass 2 kernel -----------------------------

def _bn_lrelu_kernel(y_ref, scale_ref, shift_ref, o_ref):
    """y*scale + shift, LeakyReLU.  Fully parallel, HBM-bound (bf16 in, f32 out)."""
    z = y_ref[...].astype(jnp.float32) * scale_ref[...] + shift_ref[...]
    o_ref[...] = jnp.where(z >= 0, z, NEG_SLOPE * z)


# ----------------------------- wrapper -----------------------------

def basic_conv1d(x, weight, bias, gamma, beta, *, tile_l=None):
    """x: (N, C_in, L) f32, weight: (C_out, C_in, k), bias/gamma/beta: (C_out,).
    Returns (N, C_out, L_out) matching PyTorch Conv1d -> BatchNorm1d(train) -> LeakyReLU."""
    N, C_in, L = x.shape
    C_out, _, k = weight.shape
    L_out = L - k + 1
    assert L_out >= 1

    C_out_pad = _round_up(C_out, 128)
    if tile_l is None:
        TILE_L = min(512, _round_up(L_out, 8))
    else:
        TILE_L = max(8, (tile_l // 8) * 8)
    L_out_pad = _round_up(L_out, TILE_L)
    n_l = L_out_pad // TILE_L
    vmem_limit = _vmem_limit_bytes()

    x_nlc = jnp.transpose(x, (0, 2, 1))                        # NCL -> NLC (channels on lanes)

    b_row = jnp.pad(bias, (0, C_out_pad - C_out)).reshape(1, C_out_pad).astype(jnp.float32)
    g_row = jnp.pad(gamma, (0, C_out_pad - C_out)).reshape(1, C_out_pad).astype(jnp.float32)
    be_row = jnp.pad(beta, (0, C_out_pad - C_out)).reshape(1, C_out_pad).astype(jnp.float32)

    packed = (k * C_in) <= 128
    if packed:
        # Tap-packed operand: xp[n, l, kk*C_in + ci] = x[n, ci, l + kk].
        # Same HBM footprint as lane-padding x to 128, but one matmul/tile and aligned reads.
        K_pad = 128
        xp = jnp.stack([x_nlc[:, kk:kk + L_out, :] for kk in range(k)], axis=2)
        xp = xp.reshape(N, L_out, k * C_in)
        xp = jnp.pad(xp, ((0, 0), (0, L_out_pad - L_out), (0, K_pad - k * C_in)))
        x_arg = xp.astype(jnp.bfloat16)
        w_pack = jnp.transpose(weight, (2, 1, 0)).reshape(k * C_in, C_out)
        w_pack = jnp.pad(w_pack, ((0, K_pad - k * C_in), (0, C_out_pad - C_out)))
        w_arg = w_pack.astype(jnp.bfloat16)
        kernel = _make_conv_stats_kernel_packed(TILE_L, L_out)
        x_spec = pl.BlockSpec((1, TILE_L, K_pad), lambda n, l: (n, l, 0))
        w_spec = pl.BlockSpec((K_pad, C_out_pad), lambda n, l: (0, 0))
    else:
        C_in_pad = _round_up(C_in, 128)
        L_x_pad = _round_up(L_out_pad + k - 1, 8)
        xs = jnp.pad(x_nlc, ((0, 0), (0, L_x_pad - L), (0, C_in_pad - C_in)))
        x_arg = xs.astype(jnp.bfloat16)
        w_k = jnp.transpose(weight, (2, 1, 0))                 # (k, C_in, C_out)
        w_k = jnp.pad(w_k, ((0, 0), (0, C_in_pad - C_in), (0, C_out_pad - C_out)))
        w_arg = w_k.astype(jnp.bfloat16)
        kernel = _make_conv_stats_kernel_taps(k, TILE_L, L_out, C_out_pad)
        # whole x slab resident per batch element (DMA'd once per n); y tiled over L
        x_spec = pl.BlockSpec((1, L_x_pad, C_in_pad), lambda n, l: (n, 0, 0))
        w_spec = pl.BlockSpec((k, C_in_pad, C_out_pad), lambda n, l: (0, 0, 0))

    # ---- pass 1: conv + bias (bf16 MXU, f32 acc), per-batch partial BN statistics ----
    y_pad, psum, pssq = pl.pallas_call(
        kernel,
        out_shape=(
            jax.ShapeDtypeStruct((N, L_out_pad, C_out_pad), jnp.bfloat16),
            jax.ShapeDtypeStruct((N, 1, C_out_pad), jnp.float32),
            jax.ShapeDtypeStruct((N, 1, C_out_pad), jnp.float32),
        ),
        grid=(N, n_l),
        in_specs=[
            x_spec,
            w_spec,
            pl.BlockSpec((1, C_out_pad), lambda n, l: (0, 0)),
        ],
        out_specs=(
            pl.BlockSpec((1, TILE_L, C_out_pad), lambda n, l: (n, l, 0)),
            pl.BlockSpec((1, 1, C_out_pad), lambda n, l: (n, 0, 0)),   # resident over l
            pl.BlockSpec((1, 1, C_out_pad), lambda n, l: (n, 0, 0)),   # resident over l
        ),
        compiler_params=pltpu.CompilerParams(
            dimension_semantics=("parallel", "arbitrary"),
            vmem_limit_bytes=vmem_limit,
        ),
    )(x_arg, w_arg, b_row)

    # ---- tiny global reduction + scale/shift precompute (f32, wrapper-side) ----
    count = float(N * L_out)
    s = jnp.sum(psum[:, 0, :], axis=0, keepdims=True)           # (1, C_out_pad)
    ss = jnp.sum(pssq[:, 0, :], axis=0, keepdims=True)
    mean = s / count
    var = jnp.maximum(ss / count - mean * mean, 0.0)             # biased var, clamped >= 0
    scale = g_row * jax.lax.rsqrt(var + EPS)
    shift = be_row - mean * scale

    # ---- pass 2: scale/shift + LeakyReLU, fully parallel, lane-dense ----
    out_pad = pl.pallas_call(
        _bn_lrelu_kernel,
        out_shape=jax.ShapeDtypeStruct((N, L_out_pad, C_out_pad), jnp.float32),
        grid=(N, n_l),
        in_specs=[
            pl.BlockSpec((1, TILE_L, C_out_pad), lambda n, l: (n, l, 0)),
            pl.BlockSpec((1, C_out_pad), lambda n, l: (0, 0)),
            pl.BlockSpec((1, C_out_pad), lambda n, l: (0, 0)),
        ],
        out_specs=pl.BlockSpec((1, TILE_L, C_out_pad), lambda n, l: (n, l, 0)),
        compiler_params=pltpu.CompilerParams(
            dimension_semantics=("parallel", "parallel"),
            vmem_limit_bytes=vmem_limit,
        ),
    )(y_pad, scale, shift)

    # strip padding; single layout transpose back to PyTorch NCL at the model boundary
    out = out_pad[:, :L_out, :C_out]
    return jnp.transpose(out, (0, 2, 1))


# ----------------------------- reference & test -----------------------------

def reference(x, weight, bias, gamma, beta):
    # Pure-JAX f32 reference (Conv1d -> BatchNorm1d train-mode -> LeakyReLU).
    y = jax.lax.conv_general_dilated(
        x, weight, window_strides=(1,), padding="VALID",
        dimension_numbers=("NCH", "OIH", "NCH"))
    y = y + bias[None, :, None]
    mean = jnp.mean(y, axis=(0, 2), keepdims=True)
    var = jnp.mean((y - mean) ** 2, axis=(0, 2), keepdims=True)
    y = (y - mean) * jax.lax.rsqrt(var + EPS)
    y = y * gamma[None, :, None] + beta[None, :, None]
    return jnp.where(y >= 0, y, NEG_SLOPE * y)


if __name__ == "__main__":
    key = jax.random.PRNGKey(0)

    def run_case(name, N, C_in, L, C_out, ksize, tile_l, case_key):
        k_x, k_w, k_b, k_g, k_be = jax.random.split(case_key, 5)
        x = jax.random.normal(k_x, (N, C_in, L), dtype=jnp.float32)
        weight = jax.random.normal(k_w, (C_out, C_in, ksize), dtype=jnp.float32) * 0.1
        bias = jax.random.normal(k_b, (C_out,), dtype=jnp.float32) * 0.1
        gamma = 1.0 + 0.1 * jax.random.normal(k_g, (C_out,), dtype=jnp.float32)
        beta = 0.1 * jax.random.normal(k_be, (C_out,), dtype=jnp.float32)

        out = basic_conv1d(x, weight, bias, gamma, beta, tile_l=tile_l)
        out = jax.block_until_ready(out)
        ref = reference(x, weight, bias, gamma, beta)
        assert out.shape == (N, C_out, L - ksize + 1), (name, out.shape)
        # bf16 MXU operands -> compare against the f32 reference at bf16-level tolerance.
        err = float(jnp.max(jnp.abs(out - ref)))
        assert jnp.allclose(out, ref, atol=2e-2, rtol=2e-2), (name, err)

    k1, k2 = jax.random.split(key)
    # packed-taps path (k*C_in <= 128), 2 L-tiles per batch element
    run_case("packed", N=2, C_in=4, L=16, C_out=8, ksize=3, tile_l=8, case_key=k1)
    # per-tap matmul fallback path (k*C_in > 128), 2 L-tiles per batch element
    run_case("taps", N=2, C_in=40, L=32, C_out=8, ksize=5, tile_l=16, case_key=k2)

    print("KERNEL_OK")
</pallas_src>

<mosaic_0001>
module attributes {stable_mosaic.version = 11 : i64} {
  func.func @kernel(%arg0: i32, %arg1: i32, %arg2: memref<1x8x128xbf16, #tpu.memory_space<vmem>>, %arg3: memref<128x128xbf16, #tpu.memory_space<vmem>>, %arg4: memref<1x128xf32, #tpu.memory_space<vmem>>, %arg5: memref<1x8x128xbf16, #tpu.memory_space<vmem>>, %arg6: memref<1x1x128xf32, #tpu.memory_space<vmem>>, %arg7: memref<1x1x128xf32, #tpu.memory_space<vmem>>) attributes {dimension_semantics = [#tpu.dimension_semantics<parallel>, #tpu.dimension_semantics<arbitrary>], iteration_bounds = array<i64: 2, 2>, scalar_prefetch = 0 : i64, scratch_operands = 0 : i64, tpu.core_type = #tpu.core_type<tc>, window_params = [{transform_indices = @transform_0, window_bounds = array<i64: 1, 8, 128>}, {pipeline_mode = #tpu.pipeline_mode<synchronous>, transform_indices = @transform_1, window_bounds = array<i64: 128, 128>}, {pipeline_mode = #tpu.pipeline_mode<synchronous>, transform_indices = @transform_2, window_bounds = array<i64: 1, 128>}, {transform_indices = @transform_3, window_bounds = array<i64: 1, 8, 128>}, {transform_indices = @transform_4, window_bounds = array<i64: 1, 1, 128>}, {transform_indices = @transform_5, window_bounds = array<i64: 1, 1, 128>}]} {
    %c0 = arith.constant 0 : index
    %c0_0 = arith.constant 0 : index
    %c0_1 = arith.constant 0 : index
    %0 = vector.load %arg2[%c0, %c0_0, %c0_1] : memref<1x8x128xbf16, #tpu.memory_space<vmem>>, vector<1x8x128xbf16>
    %1 = vector.shape_cast %0 : vector<1x8x128xbf16> to vector<8x128xbf16>
    %c0_2 = arith.constant 0 : index
    %c0_3 = arith.constant 0 : index
    %2 = vector.load %arg3[%c0_2, %c0_3] : memref<128x128xbf16, #tpu.memory_space<vmem>>, vector<128x128xbf16>
    %cst = arith.constant dense<0.000000e+00> : vector<8x128xf32>
    %3 = tpu.matmul %1, %2, %cst {dimension_numbers = #tpu.dot_dimension_numbers<[1], [0], [0], [1], [0, 0, 1, 1], [], []>} : vector<8x128xbf16>, vector<128x128xbf16>, vector<8x128xf32> -> vector<8x128xf32>
    %c0_4 = arith.constant 0 : index
    %c0_5 = arith.constant 0 : index
    %4 = vector.load %arg4[%c0_4, %c0_5] : memref<1x128xf32, #tpu.memory_space<vmem>>, vector<1x128xf32>
    %5 = vector.broadcast %4 : vector<1x128xf32> to vector<8x128xf32>
    %6 = arith.addf %3, %5 : vector<8x128xf32>
    %7 = tpu.iota {dimensions = array<i32: 0>} : vector<8x1xi32>
    %c8_i32 = arith.constant 8 : i32
    %8 = arith.muli %arg1, %c8_i32 : i32
    %9 = vector.broadcast %8 : i32 to vector<8x1xi32>
    %10 = arith.addi %7, %9 : vector<8x1xi32>
    %c14_i32 = arith.constant 14 : i32
    %11 = vector.broadcast %c14_i32 : i32 to vector<8x1xi32>
    %12 = arith.cmpi slt, %10, %11 : vector<8x1xi32>
    %cst_6 = arith.constant 0.000000e+00 : f32
    %13 = vector.shape_cast %12 : vector<8x1xi1> to vector<8x1xi1>
    %14 = vector.broadcast %13 : vector<8x1xi1> to vector<8x128xi1>
    %15 = vector.broadcast %cst_6 : f32 to vector<8x128xf32>
    %16 = arith.select %14, %6, %15 : vector<8x128xi1>, vector<8x128xf32>
    %c0_i32 = arith.constant 0 : i32
    %17 = arith.cmpi eq, %arg1, %c0_i32 : i32
    %18 = arith.extui %17 : i1 to i32
    %c0_i32_7 = arith.constant 0 : i32
    %19 = arith.cmpi ne, %18, %c0_i32_7 : i32
    scf.if %19 {
      %cst_25 = arith.constant 0.000000e+00 : f32
      %36 = vector.broadcast %cst_25 : f32 to vector<1x1x128xf32>
      %c0_26 = arith.constant 0 : index
      %c0_27 = arith.constant 0 : index
      %c0_28 = arith.constant 0 : index
      %37 = vector.load %arg6[%c0_26, %c0_27, %c0_28] : memref<1x1x128xf32, #tpu.memory_space<vmem>>, vector<1x1x128xf32>
      tpu.vector_store %arg6[%c0_26, %c0_27, %c0_28], %36 {strides = array<i32>} : memref<1x1x128xf32, #tpu.memory_space<vmem>>, vector<1x1x128xf32>,
      %cst_29 = arith.constant 0.000000e+00 : f32
      %38 = vector.broadcast %cst_29 : f32 to vector<1x1x128xf32>
      %c0_30 = arith.constant 0 : index
      %c0_31 = arith.constant 0 : index
      %c0_32 = arith.constant 0 : index
      %39 = vector.load %arg7[%c0_30, %c0_31, %c0_32] : memref<1x1x128xf32, #tpu.memory_space<vmem>>, vector<1x1x128xf32>
      tpu.vector_store %arg7[%c0_30, %c0_31, %c0_32], %38 {strides = array<i32>} : memref<1x1x128xf32, #tpu.memory_space<vmem>>, vector<1x1x128xf32>,
    } else {
    }
    %c0_8 = arith.constant 0 : index
    %c0_9 = arith.constant 0 : index
    %c0_10 = arith.constant 0 : index
    %20 = vector.load %arg6[%c0_8, %c0_9, %c0_10] : memref<1x1x128xf32, #tpu.memory_space<vmem>>, vector<1x1x128xf32>
    %cst_11 = arith.constant dense<0.000000e+00> : vector<128xf32>
    %21 = vector.multi_reduction <add>, %16, %cst_11 [0] : vector<8x128xf32> to vector<128xf32>
    %22 = vector.shape_cast %21 : vector<128xf32> to vector<1x128xf32>
    %23 = vector.shape_cast %22 : vector<1x128xf32> to vector<1x1x128xf32>
    %24 = arith.addf %20, %23 : vector<1x1x128xf32>
    %c0_12 = arith.constant 0 : index
    %c0_13 = arith.constant 0 : index
    %c0_14 = arith.constant 0 : index
    %25 = vector.load %arg6[%c0_12, %c0_13, %c0_14] : memref<1x1x128xf32, #tpu.memory_space<vmem>>, vector<1x1x128xf32>
    tpu.vector_store %arg6[%c0_12, %c0_13, %c0_14], %24 {strides = array<i32>} : memref<1x1x128xf32, #tpu.memory_space<vmem>>, vector<1x1x128xf32>,
    %c0_15 = arith.constant 0 : index
    %c0_16 = arith.constant 0 : index
    %c0_17 = arith.constant 0 : index
    %26 = vector.load %arg7[%c0_15, %c0_16, %c0_17] : memref<1x1x128xf32, #tpu.memory_space<vmem>>, vector<1x1x128xf32>
    %27 = arith.mulf %16, %16 : vector<8x128xf32>
    %cst_18 = arith.constant dense<0.000000e+00> : vector<128xf32>
    %28 = vector.multi_reduction <add>, %27, %cst_18 [0] : vector<8x128xf32> to vector<128xf32>
    %29 = vector.shape_cast %28 : vector<128xf32> to vector<1x128xf32>
    %30 = vector.shape_cast %29 : vector<1x128xf32> to vector<1x1x128xf32>
    %31 = arith.addf %26, %30 : vector<1x1x128xf32>
    %c0_19 = arith.constant 0 : index
    %c0_20 = arith.constant 0 : index
    %c0_21 = arith.constant 0 : index
    %32 = vector.load %arg7[%c0_19, %c0_20, %c0_21] : memref<1x1x128xf32, #tpu.memory_space<vmem>>, vector<1x1x128xf32>
    tpu.vector_store %arg7[%c0_19, %c0_20, %c0_21], %31 {strides = array<i32>} : memref<1x1x128xf32, #tpu.memory_space<vmem>>, vector<1x1x128xf32>,
    %33 = arith.truncf %6 : vector<8x128xf32> to vector<8x128xbf16>
    %34 = vector.shape_cast %33 : vector<8x128xbf16> to vector<1x8x128xbf16>
    %c0_22 = arith.constant 0 : index
    %c0_23 = arith.constant 0 : index
    %c0_24 = arith.constant 0 : index
    %35 = vector.load %arg5[%c0_22, %c0_23, %c0_24] : memref<1x8x128xbf16, #tpu.memory_space<vmem>>, vector<1x8x128xbf16>
    tpu.vector_store %arg5[%c0_22, %c0_23, %c0_24], %34 {strides = array<i32>} : memref<1x8x128xbf16, #tpu.memory_space<vmem>>, vector<1x8x128xbf16>,
    return
  }
  func.func @transform_0(%arg0: i32, %arg1: i32) -> (i32, i32, i32) {
    %c0_i32 = arith.constant 0 : i32
    %c0_i32_0 = arith.constant 0 : i32
    return %arg0, %arg1, %c0_i32 : i32, i32, i32
  }
  func.func @transform_1(%arg0: i32, %arg1: i32) -> (i32, i32) {
    %c0_i32 = arith.constant 0 : i32
    %c0_i32_0 = arith.constant 0 : i32
    %c0_i32_1 = arith.constant 0 : i32
    return %c0_i32, %c0_i32_0 : i32, i32
  }
  func.func @transform_2(%arg0: i32, %arg1: i32) -> (i32, i32) {
    %c0_i32 = arith.constant 0 : i32
    %c0_i32_0 = arith.constant 0 : i32
    %c0_i32_1 = arith.constant 0 : i32
    return %c0_i32, %c0_i32_0 : i32, i32
  }
  func.func @transform_3(%arg0: i32, %arg1: i32) -> (i32, i32, i32) {
    %c0_i32 = arith.constant 0 : i32
    %c0_i32_0 = arith.constant 0 : i32
    return %arg0, %arg1, %c0_i32 : i32, i32, i32
  }
  func.func @transform_4(%arg0: i32, %arg1: i32) -> (i32, i32, i32) {
    %c0_i32 = arith.constant 0 : i32
    %c0_i32_0 = arith.constant 0 : i32
    %c0_i32_1 = arith.constant 0 : i32
    return %arg0, %c0_i32, %c0_i32_0 : i32, i32, i32
  }
  func.func @transform_5(%arg0: i32, %arg1: i32) -> (i32, i32, i32) {
    %c0_i32 = arith.constant 0 : i32
    %c0_i32_0 = arith.constant 0 : i32
    %c0_i32_1 = arith.constant 0 : i32
    return %arg0, %c0_i32, %c0_i32_0 : i32, i32, i32
  }
}

</mosaic_0001>

<llo_original>
// kernel: tpu_custom_call.1
$region0: #{tpu_custom_call.1}
  #allocation0 [shape = 'u32[]', space=smem, size = 0x4, offset = 0x4, fixed_abs, tag = 'smem constant byte address 0x4 - core index']
  #allocation1 [shape = 'u32[144,128]{1,0:T(1,128)}', space=vmem, size = 0x12000, scoped, tag = 'internal scratch']
  %s0 = inlined_call_operand.hbm [shape: bf16[2,16,128], index: 0, kind: input, shape index: {}]
  %s1 = inlined_call_operand.hbm [shape: bf16[128,128], index: 1, kind: input, shape index: {}]
  %s2 = inlined_call_operand.vmem [shape: f32[1,128], index: 2, kind: input, shape index: {}]
  %s3 = inlined_call_operand.hbm [shape: bf16[2,16,128], index: 3, kind: output, shape index: {0}]
  %s4 = inlined_call_operand.hbm [shape: f32[2,1,128], index: 4, kind: output, shape index: {1}]
  %s5 = inlined_call_operand.hbm [shape: f32[2,1,128], index: 5, kind: output, shape index: {2}]
  %6 = xla_tuple %s3, %s4, %s5
  %s7 = sld [smem:[#allocation0]]
  $region73: #{tpu_custom_call.1} parent=0
    _
  %s9 = ssub.s32 1, %s7
  %s10 = scalar_select 0, %s9, %s7
  $region1: #{tpu_custom_call.1} parent=0
    #allocation2 [shape = 'u8[4096]{0}', space=vmem, size = 0x1000, scoped, tag = 'input window, operand 0']
    #allocation3 [shape = 's32[2]{0}', space=sflag, size = 0x8, scoped, tag = 'scoped memory for tpu_custom_call.1']
    #allocation4 [shape = 's32[2]{0}', space=sflag, size = 0x8, scoped, tag = 'scoped memory for tpu_custom_call.1']
    #allocation5 [shape = 'u8[32768]{0}', space=vmem, size = 0x8000, scoped, tag = 'input window, operand 1, single buffered']
    #allocation6 [shape = 's32[1]{0}', space=sflag, size = 0x4, scoped, tag = 'scoped memory for tpu_custom_call.1']
    #allocation7 [shape = 'u8[4096]{0}', space=vmem, size = 0x1000, scoped, tag = 'output window, operand 0']
    #allocation8 [shape = 'u8[1024]{0}', space=vmem, size = 0x400, scoped, tag = 'output window, operand 1']
    #allocation9 [shape = 's32[2]{0}', space=sflag, size = 0x8, scoped, tag = 'scoped memory for tpu_custom_call.1']
    #allocation10 [shape = 'u8[1024]{0}', space=vmem, size = 0x400, scoped, tag = 'output window, operand 2']
    %11 = vsyncpa [#allocation3], 0
    %s12 = scalar_lea.sflag [#allocation3], 1
    %13 = vsyncpa %s12, 0
    %14 = vsyncpa [#allocation6], 0
    %15 = vsyncpa [#allocation4], 0
    %s16 = scalar_lea.sflag [#allocation4], 1
    %17 = vsyncpa %s16, 0
    %18 = vsyncpa [#allocation9], 0
    %s19 = scalar_lea.sflag [#allocation9], 1
    %20 = vsyncpa %s19, 0
    loop: start=0, step=1, limit=6
    $region2: #{tpu_custom_call.1} parent=1 // loop_pre_header
      _
    $region3: #{tpu_custom_call.1} parent=1 // loop_header
      %s22 = sphi 0, %s26
      %p23 = scmp.ge.s32.totalorder %s22, 6
      %s29 = sphi 0, %s41
      %s30 = sphi 0, %s37
      %s31 = sphi 0, %s29
      %s32 = sphi 0, %s30
      %s33 = sphi 0, %s31
      %s34 = sphi 0, %s32
      %s46 = sphi 0, %s48
      %s49 = sphi 0, %s46
      %s50 = sphi 0, %s49
      %s66 = sphi 0, %s50
      %s70 = sphi 0, %s70
      %s72 = sphi 0, %s70
      %s73 = sphi 0, %s72
      %s87 = sphi 0, %s73
      %s91 = sphi 0, %s91
      %s93 = sphi 0, %s91
      %s94 = sphi 0, %s93
      %s108 = sphi 0, %s94
      %s116 = sphi 0, %s118
      %s119 = sphi 0, %s116
      %s120 = sphi 0, %s119
      %s136 = sphi 0, %s120
      %s142 = sphi 0, %s144
      %s145 = sphi 0, %s142
      %s146 = sphi 0, %s145
      %s162 = sphi 0, %s146
      %s168 = sphi 0, %s170
      %s171 = sphi 0, %s168
      %s172 = sphi 0, %s171
      %s188 = sphi 0, %s172
    $region4: #{tpu_custom_call.1} parent=1 // loop_header_branch
      %25 = sbr.rel (%p23) target = $region8
    $region5: #{tpu_custom_call.1} parent=1 // loop_body
      %s27 = ssub.s32 %s22, 1
      %s28 = ssub.s32 %s22, 2
      %s35 = sadd.s32 1, %s30
      %p36 = scmp.ge.s32.totalorder %s35, 2
      %s37 = scalar_select %p36, 0, %s35
      %s38 = sadd.s32 1, %s29
      %s39 = scalar_select %p36, %s38, %s29
      %p40 = scmp.ge.s32.totalorder %s39, 2
      %s41 = scalar_select %p40, 0, %s39
      %s42 = ssub.s32 %s29, %s41
      %s43 = ssub.s32 %s30, %s37
      %s44 = sor.u32 %s42, %s43
      %p45 = scmp.eq.s32.totalorder %s44, 0
      %s47 = sadd.s32 %s46, 1
      %s48 = scalar_select %p45, %s46, %s47
      %p51 = pneg %p45
      %p52 = scmp.eq.s32.totalorder %s22, 3
      %p53 = por %p51, %p52
      %p54 = scmp.ne.s32.totalorder %s46, %s49
      %p55 = scmp.eq.s32.totalorder %s22, 0
      %p56 = por %p54, %p55
      %p57 = scmp.ne.s32.totalorder %s46, %s49
      %p58 = scmp.eq.s32.totalorder %s27, 3
      %p59 = por %p57, %p58
      %p60 = scmp.ne.s32.totalorder %s49, %s50
      %p61 = scmp.eq.s32.totalorder %s27, 0
      %p62 = por %p60, %p61
      %p63 = scmp.ne.s32.totalorder %s49, %s50
      %p64 = scmp.eq.s32.totalorder %s28, 3
      %p65 = por %p63, %p64
      %p67 = scmp.ne.s32.totalorder %s50, %s66
      %p68 = scmp.eq.s32.totalorder %s28, 0
      %p69 = por %p67, %p68
      %s71 = sadd.s32 %s70, 1
      %p74 = scmp.eq.s32.totalorder %s22, 3
      %p75 = scmp.ne.s32.totalorder %s70, %s72
      %p76 = scmp.eq.s32.totalorder %s22, 0
      %p77 = por %p75, %p76
      %p78 = scmp.ne.s32.totalorder %s70, %s72
      %p79 = scmp.eq.s32.totalorder %s27, 3
      %p80 = por %p78, %p79
      %p81 = scmp.ne.s32.totalorder %s72, %s73
      %p82 = scmp.eq.s32.totalorder %s27, 0
      %p83 = por %p81, %p82
      %p84 = scmp.ne.s32.totalorder %s72, %s73
      %p85 = scmp.eq.s32.totalorder %s28, 3
      %p86 = por %p84, %p85
      %p88 = scmp.ne.s32.totalorder %s73, %s87
      %p89 = scmp.eq.s32.totalorder %s28, 0
      %p90 = por %p88, %p89
      %s92 = sadd.s32 %s91, 1
      %p95 = scmp.eq.s32.totalorder %s22, 3
      %p96 = scmp.ne.s32.totalorder %s91, %s93
      %p97 = scmp.eq.s32.totalorder %s22, 0
      %p98 = por %p96, %p97
      %p99 = scmp.ne.s32.totalorder %s91, %s93
      %p100 = scmp.eq.s32.totalorder %s27, 3
      %p101 = por %p99, %p100
      %p102 = scmp.ne.s32.totalorder %s93, %s94
      %p103 = scmp.eq.s32.totalorder %s27, 0
      %p104 = por %p102, %p103
      %p105 = scmp.ne.s32.totalorder %s93, %s94
      %p106 = scmp.eq.s32.totalorder %s28, 3
      %p107 = por %p105, %p106
      %p109 = scmp.ne.s32.totalorder %s94, %s108
      %p110 = scmp.eq.s32.totalorder %s28, 0
      %p111 = por %p109, %p110
      %s112 = ssub.s32 %s29, %s41
      %s113 = ssub.s32 %s30, %s37
      %s114 = sor.u32 %s112, %s113
      %p115 = scmp.eq.s32.totalorder %s114, 0
      %s117 = sadd.s32 %s116, 1
      %s118 = scalar_select %p115, %s116, %s117
      %p121 = pneg %p115
      %p122 = scmp.eq.s32.totalorder %s22, 3
      %p123 = por %p121, %p122
      %p124 = scmp.ne.s32.totalorder %s116, %s119
      %p125 = scmp.eq.s32.totalorder %s22, 0
      %p126 = por %p124, %p125
      %p127 = scmp.ne.s32.totalorder %s116, %s119
      %p128 = scmp.eq.s32.totalorder %s27, 3
      %p129 = por %p127, %p128
      %p130 = scmp.ne.s32.totalorder %s119, %s120
      %p131 = scmp.eq.s32.totalorder %s27, 0
      %p132 = por %p130, %p131
      %p133 = scmp.ne.s32.totalorder %s119, %s120
      %p134 = scmp.eq.s32.totalorder %s28, 3
      %p135 = por %p133, %p134
      %p137 = scmp.ne.s32.totalorder %s120, %s136
      %p138 = scmp.eq.s32.totalorder %s28, 0
      %p139 = por %p137, %p138
      %s140 = ssub.s32 %s29, %s41
      %p141 = scmp.eq.s32.totalorder %s140, 0
      %s143 = sadd.s32 %s142, 1
      %s144 = scalar_select %p141, %s142, %s143
      %p147 = pneg %p141
      %p148 = scmp.eq.s32.totalorder %s22, 3
      %p149 = por %p147, %p148
      %p150 = scmp.ne.s32.totalorder %s142, %s145
      %p151 = scmp.eq.s32.totalorder %s22, 0
      %p152 = por %p150, %p151
      %p153 = scmp.ne.s32.totalorder %s142, %s145
      %p154 = scmp.eq.s32.totalorder %s27, 3
      %p155 = por %p153, %p154
      %p156 = scmp.ne.s32.totalorder %s145, %s146
      %p157 = scmp.eq.s32.totalorder %s27, 0
      %p158 = por %p156, %p157
      %p159 = scmp.ne.s32.totalorder %s145, %s146
      %p160 = scmp.eq.s32.totalorder %s28, 3
      %p161 = por %p159, %p160
      %p163 = scmp.ne.s32.totalorder %s146, %s162
      %p164 = scmp.eq.s32.totalorder %s28, 0
      %p165 = por %p163, %p164
      %s166 = ssub.s32 %s29, %s41
      %p167 = scmp.eq.s32.totalorder %s166, 0
      %s169 = sadd.s32 %s168, 1
      %s170 = scalar_select %p167, %s168, %s169
      %p173 = pneg %p167
      %p174 = scmp.eq.s32.totalorder %s22, 3
      %p175 = por %p173, %p174
      %p176 = scmp.ne.s32.totalorder %s168, %s171
      %p177 = scmp.eq.s32.totalorder %s22, 0
      %p178 = por %p176, %p177
      %p179 = scmp.ne.s32.totalorder %s168, %s171
      %p180 = scmp.eq.s32.totalorder %s27, 3
      %p181 = por %p179, %p180
      %p182 = scmp.ne.s32.totalorder %s171, %s172
      %p183 = scmp.eq.s32.totalorder %s27, 0
      %p184 = por %p182, %p183
      %p185 = scmp.ne.s32.totalorder %s171, %s172
      %p186 = scmp.eq.s32.totalorder %s28, 3
      %p187 = por %p185, %p186
      %p189 = scmp.ne.s32.totalorder %s172, %s188
      %p190 = scmp.eq.s32.totalorder %s28, 0
      %p191 = por %p189, %p190
      %p192 = scmp.le.s32.totalorder 1, %s22
      %p193 = scmp.lt.s32.totalorder %s22, 5
      %p194 = pnand %p192, %p193
      %p195 = pneg %p194
      // Predicated region
      $region9: #{tpu_custom_call.1} parent=5 // pred_check
        _
      $region10: #{tpu_custom_call.1} parent=5 // pred_check_branch
        %197 = sbr.rel (%p194) target = $region12
      $region11: #{tpu_custom_call.1} parent=5 // pred_region
        %s198 = ssub.s32 %s22, 1
        // Predicated region
        $region13: #{tpu_custom_call.1} parent=11 // pred_check
          %p199 = pneg %p83
        $region14: #{tpu_custom_call.1} parent=11 // pred_check_branch
          %201 = sbr.rel (%p199) target = $region16
        $region15: #{tpu_custom_call.1} parent=11 // pred_region
          %s203 = ssub.s32 1024, 1024
          %204 = vsyncadd [#allocation6], %s203
          %s205 = sshll.u32 [#allocation5], 4
          %s206 = int_to_ptr.vmem [resolvable:$true] %s205
          %211 = dma.hbm_to_vmem [thread:$0]  %s1, 1024, %s206, [#allocation6], 64, 64, 4
        $region16: #{tpu_custom_call.1} parent=11 // pred_fallthru
          _
        // Predicated region
        $region17: #{tpu_custom_call.1} parent=11 // pred_check
          %p212 = pneg %p104
        $region18: #{tpu_custom_call.1} parent=11 // pred_check_branch
          %214 = sbr.rel (%p212) target = $region20
        $region19: #{tpu_custom_call.1} parent=11 // pred_region
          _
        $region20: #{tpu_custom_call.1} parent=11 // pred_fallthru
          _
      $region12: #{tpu_custom_call.1} parent=5 // pred_fallthru
        _
      %p215 = scmp.lt.s32.totalorder %s22, 4
      // Predicated region
      $region21: #{tpu_custom_call.1} parent=5 // pred_check
        %p216 = pneg %p215
      $region22: #{tpu_custom_call.1} parent=5 // pred_check_branch
        %218 = sbr.rel (%p216) target = $region24
      $region23: #{tpu_custom_call.1} parent=5 // pred_region
        // Predicated region
        $region25: #{tpu_custom_call.1} parent=23 // pred_check
          %p219 = pneg %p56
        $region26: #{tpu_custom_call.1} parent=23 // pred_check_branch
          %221 = sbr.rel (%p219) target = $region28
        $region27: #{tpu_custom_call.1} parent=23 // pred_region
          %s222 = sand.u32 %s46, 1
          %s223 = scalar_lea.sflag [#allocation3], %s222
          %s224 = sand.u32 %s46, 1
          %s225 = smul.addr %s224, 4
          %s226 = scalar_lea.vmem [#allocation2], %s225
          %s228 = ssub.s32 64, 64
          %229 = vsyncadd %s223, %s228
          %s230 = smul.addr %s29, 2
          %s231 = sadd.s32 %s30, %s230
          %s232 = smul.addr %s231, 64
          %s233 = scalar_lea.hbm %s0, %s232
          %s235 = sshll.u32 %s226, 4
          %s236 = int_to_ptr.vmem [resolvable:$true] %s235
          %238 = dma.hbm_to_vmem [thread:$0]  %s233, 64, %s236, %s223
        $region28: #{tpu_custom_call.1} parent=23 // pred_fallthru
          _
      $region24: #{tpu_custom_call.1} parent=5 // pred_fallthru
        _
      %p239 = scmp.le.s32.totalorder 1, %s22
      %p240 = scmp.lt.s32.totalorder %s22, 5
      %p241 = pnand %p239, %p240
      %p242 = pneg %p241
      // Predicated region
      $region29: #{tpu_custom_call.1} parent=5 // pred_check
        _
      $region30: #{tpu_custom_call.1} parent=5 // pred_check_branch
        %244 = sbr.rel (%p241) target = $region32
      $region31: #{tpu_custom_call.1} parent=5 // pred_region
        %s245 = ssub.s32 %s22, 1
        %s246 = sand.u32 %s49, 1
        %s247 = scalar_lea.sflag [#allocation3], %s246
        %s248 = sand.u32 %s49, 1
        %s249 = smul.addr %s248, 4
        %s250 = scalar_lea.vmem [#allocation2], %s249
        // Predicated region
        $region33: #{tpu_custom_call.1} parent=31 // pred_check
          %p251 = pneg %p62
        $region34: #{tpu_custom_call.1} parent=31 // pred_check_branch
          %253 = sbr.rel (%p251) target = $region36
        $region35: #{tpu_custom_call.1} parent=31 // pred_region
          %254 = dma.done %s247, 64
        $region36: #{tpu_custom_call.1} parent=31 // pred_fallthru
          _
        // Predicated region
        $region37: #{tpu_custom_call.1} parent=31 // pred_check
          %p255 = pneg %p83
        $region38: #{tpu_custom_call.1} parent=31 // pred_check_branch
          %257 = sbr.rel (%p255) target = $region40
        $region39: #{tpu_custom_call.1} parent=31 // pred_region
          %258 = dma.done [#allocation6], 1024
        $region40: #{tpu_custom_call.1} parent=31 // pred_fallthru
          _
        %s259 = sand.u32 %s49, 1
        %s260 = scalar_lea.sflag [#allocation3], %s259
        %s261 = sand.u32 %s49, 1
        %s262 = smul.addr %s261, 4
        %s263 = scalar_lea.vmem [#allocation2], %s262
        %p264 = pneg %p62
        %p265 = pneg %p59
        %p266 = pneg %p83
        %p267 = pneg %p80
        %p268 = pneg %p104
        %p269 = pneg %p101
        %p270 = pneg %p132
        %p271 = pneg %p129
        %s272 = sand.u32 %s119, 1
        %s273 = scalar_lea.sflag [#allocation4], %s272
        %s274 = sand.u32 %s119, 1
        %s275 = smul.addr %s274, 4
        %s276 = scalar_lea.vmem [#allocation7], %s275
        %p277 = pneg %p158
        %p278 = pneg %p155
        %s279 = sand.u32 %s27, 1
        %s280 = scalar_lea.sflag [#allocation9], %s279
        %s281 = sand.u32 %s145, 1
        %s282 = scalar_lea.vmem [#allocation8], %s281
        %p283 = pneg %p184
        %p284 = pneg %p181
        %s285 = sand.u32 %s27, 1
        %s286 = scalar_lea.sflag [#allocation9], %s285
        %s287 = sand.u32 %s171, 1
        %s288 = scalar_lea.vmem [#allocation10], %s287
        %v290 = vld [vmem:[%s250] sm:$0xf]
        %v291 = vld [vmem:[#allocation5] sm:$0xf]
        %v292 = vld [vmem:[#allocation5 + $0x4] sm:$0xf]
        %v293 = vld [vmem:[#allocation5 + $0x8] sm:$0xf]
        %v294 = vld [vmem:[#allocation5 + $0xc] sm:$0xf]
        %v295 = vld [vmem:[#allocation5 + $0x10] sm:$0xf]
        %v296 = vld [vmem:[#allocation5 + $0x14] sm:$0xf]
        %v297 = vld [vmem:[#allocation5 + $0x18] sm:$0xf]
        %v298 = vld [vmem:[#allocation5 + $0x1c] sm:$0xf]
        %v299 = vld [vmem:[#allocation5 + $0x20] sm:$0xf]
        %v300 = vld [vmem:[#allocation5 + $0x24] sm:$0xf]
        %v301 = vld [vmem:[#allocation5 + $0x28] sm:$0xf]
        %v302 = vld [vmem:[#allocation5 + $0x2c] sm:$0xf]
        %v303 = vld [vmem:[#allocation5 + $0x30] sm:$0xf]
        %v304 = vld [vmem:[#allocation5 + $0x34] sm:$0xf]
        %v305 = vld [vmem:[#allocation5 + $0x38] sm:$0xf]
        %v306 = vld [vmem:[#allocation5 + $0x3c] sm:$0xf]
        %v307 = vld [vmem:[%s2] sm:$0x1]
        %v309 = vlaneseq
        %v310 = vshrl.u32 %v309, 7
        %v311 = vsub.s32 0, %v310
        %v312 = vrot.slane %v307, %v311
        %v330 = vunpack.c.l.b16 %v291
        %v331 = vunpack.c.l.b16 %v292
        %v332 = vunpack.c.l.b16 %v293
        %v333 = vunpack.c.l.b16 %v294
        %v334 = vunpack.c.l.b16 %v295
        %v335 = vunpack.c.l.b16 %v296
        %v336 = vunpack.c.l.b16 %v297
        %v337 = vunpack.c.l.b16 %v298
        %v338 = vunpack.c.l.b16 %v299
        %v339 = vunpack.c.l.b16 %v300
        %v340 = vunpack.c.l.b16 %v301
        %v341 = vunpack.c.l.b16 %v302
        %v342 = vunpack.c.l.b16 %v303
        %v343 = vunpack.c.l.b16 %v304
        %v344 = vunpack.c.l.b16 %v305
        %v345 = vunpack.c.l.b16 %v306
        %v346 = vpack.c.b16 %v331, %v330
        %v347 = vpack.c.b16 %v333, %v332
        %v348 = vpack.c.b16 %v335, %v334
        %v349 = vpack.c.b16 %v337, %v336
        %v350 = vpack.c.b16 %v339, %v338
        %v351 = vpack.c.b16 %v341, %v340
        %v352 = vpack.c.b16 %v343, %v342
        %v353 = vpack.c.b16 %v345, %v344
        %362 = vmatprep.subr.bf16.mxu0 0
        %363 = vmatpush1.bf16.msra.mxu0 %v346
        %364 = vmatprep.subr.bf16.mxu0 0
        %365 = vmatpush1.bf16.msra.mxu0 %v347
        %366 = vmatprep.subr.bf16.mxu0 0
        %367 = vmatpush1.bf16.msra.mxu0 %v348
        %368 = vmatprep.subr.bf16.mxu0 0
        %369 = vmatpush1.bf16.msra.mxu0 %v349
        %370 = vmatprep.subr.bf16.mxu0 0
        %371 = vmatpush1.bf16.msra.mxu0 %v350
        %372 = vmatprep.subr.bf16.mxu0 0
        %373 = vmatpush1.bf16.msra.mxu0 %v351
        %374 = vmatprep.subr.bf16.mxu0 0
        %375 = vmatpush1.bf16.msra.mxu0 %v352
        %376 = vmatprep.subr.bf16.mxu0 0
        %377 = vmatpush1.bf16.msra.mxu0 %v353
        %378 = vmatprep.subr.bf16.mxu0 0
        %379 = vmatpush1.bf16.msra.mxu0 0
        %380 = vmatprep.subr.bf16.mxu0 0
        %381 = vmatpush1.bf16.msra.mxu0 0
        %382 = vmatprep.subr.bf16.mxu0 0
        %383 = vmatpush1.bf16.msra.mxu0 0
        %384 = vmatprep.subr.bf16.mxu0 0
        %385 = vmatpush1.bf16.msra.mxu0 0
        %386 = vmatprep.subr.bf16.mxu0 0
        %387 = vmatpush1.bf16.msra.mxu0 0
        %388 = vmatprep.subr.bf16.mxu0 0
        %389 = vmatpush1.bf16.msra.mxu0 0
        %390 = vmatprep.subr.bf16.mxu0 0
        %391 = vmatpush1.bf16.msra.mxu0 0
        %392 = vmatprep.subr.bf16.mxu0 0
        %393 = vmatpush1.bf16.msra.mxu0 0
        %394 = vmatprep.mubr.bf16.mxu0 0
        %395 = vmatmul.mubr.bf16.gmra.mrb[0].mxu0 %v290
        %v396 = vpop.f32.mrb[0].mxu0
        %v397 = vadd.f32 %v312, %v396
        %v398 = vpop.f32.mrb[0].mxu0
        %v399 = vpop.f32.mrb[0].mxu0
        %v400 = vpop.f32.mrb[0].mxu0
        %401 = vdwg.mxu0
        %v402 = vlaneseq
        %v403 = vshrl.u32 %v402, 7
        %s404 = smul.u32 %s32, 8
        %v405 = vstv %s404
        %v406 = vadd.s32 %v403, %v405
        %vm407 = vcmp.lt.s32.totalorder %v406, 14
        %v408 = vsel %vm407, 1, 0
        %vm409 = vcmp.eq.s32.totalorder %v408, 1
        %v410 = vsel %vm409, %v397, 0.0
        %p411 = scmp.eq.s32.totalorder %s32, 0
        // Predicated region
        $region41: #{tpu_custom_call.1} parent=31 // pred_check
          %p412 = pneg %p411
        $region42: #{tpu_custom_call.1} parent=31 // pred_check_branch
          %414 = sbr.rel (%p412) target = $region44
        $region43: #{tpu_custom_call.1} parent=31 // pred_region
          %415 = vst [vmem:[%s282] sm:$0x1] 0.0
          %416 = vst [vmem:[%s288] sm:$0x1] 0.0
        $region44: #{tpu_custom_call.1} parent=31 // pred_fallthru
          _
        %v417 = vld [vmem:[%s282] sm:$0x1]
        %v418 = vrot.slane %v410, 4
        %v419 = vadd.f32 %v410, %v418
        %v420 = vrot.slane %v419, 2
        %v421 = vadd.f32 %v419, %v420
        %v422 = vrot.slane %v421, 1
        %v423 = vadd.f32 %v421, %v422
        %v424 = vadd.f32 %v417, %v423
        %425 = vst [vmem:[%s282] sm:$0x1] %v424
        %v426 = vld [vmem:[%s288] sm:$0x1]
        %v427 = vmul.f32 %v410, %v410
        %v428 = vrot.slane %v427, 4
        %v429 = vadd.f32 %v427, %v428
        %v430 = vrot.slane %v429, 2
        %v431 = vadd.f32 %v429, %v430
        %v432 = vrot.slane %v431, 1
        %v433 = vadd.f32 %v431, %v432
        %v434 = vadd.f32 %v426, %v433
        %435 = vst [vmem:[%s288] sm:$0x1] %v434
        %v436 = vpack.c.bf16 %v397, %v397
        %437 = vst [vmem:[%s276] sm:$0xf] %v436
        %s438 = sand.u32 %s119, 1
        %s439 = scalar_lea.sflag [#allocation4], %s438
        %s440 = sand.u32 %s119, 1
        %s441 = smul.addr %s440, 4
        %s442 = scalar_lea.vmem [#allocation7], %s441
        %s443 = sand.u32 %s27, 1
        %s444 = scalar_lea.sflag [#allocation9], %s443
        %s445 = sand.u32 %s145, 1
        %s446 = scalar_lea.vmem [#allocation8], %s445
        %s447 = sand.u32 %s27, 1
        %s448 = scalar_lea.sflag [#allocation9], %s447
        %s449 = sand.u32 %s171, 1
        %s450 = scalar_lea.vmem [#allocation10], %s449
        // Predicated region
        $region45: #{tpu_custom_call.1} parent=31 // pred_check
          %p451 = pneg %p129
        $region46: #{tpu_custom_call.1} parent=31 // pred_check_branch
          %453 = sbr.rel (%p451) target = $region48
        $region47: #{tpu_custom_call.1} parent=31 // pred_region
          %s455 = ssub.s32 64, 64
          %456 = vsyncadd %s439, %s455
          %s457 = smul.addr %s31, 2
          %s458 = sadd.s32 %s32, %s457
          %s459 = smul.addr %s458, 64
          %s460 = scalar_lea.hbm %s3, %s459
          %s462 = sshll.u32 %s442, 4
          %s463 = int_to_ptr.vmem [resolvable:$true] %s462
          %465 = dma.vmem_to_hbm [thread:$0]  %s463, 64, %s460, %s439
        $region48: #{tpu_custom_call.1} parent=31 // pred_fallthru
          _
        // Predicated region
        $region49: #{tpu_custom_call.1} parent=31 // pred_check
          %p466 = pneg %p155
        $region50: #{tpu_custom_call.1} parent=31 // pred_check_branch
          %468 = sbr.rel (%p466) target = $region52
        $region51: #{tpu_custom_call.1} parent=31 // pred_region
          %s470 = ssub.s32 16, 16
          %471 = vsyncadd %s444, %s470
          %s472 = smul.addr %s31, 16
          %s473 = scalar_lea.hbm %s4, %s472
          %s475 = sshll.u32 %s446, 4
          %s476 = int_to_ptr.vmem [resolvable:$true] %s475
          %478 = dma.vmem_to_hbm [thread:$0]  %s476, 16, %s473, %s444
        $region52: #{tpu_custom_call.1} parent=31 // pred_fallthru
          _
        // Predicated region
        $region53: #{tpu_custom_call.1} parent=31 // pred_check
          %p479 = pneg %p181
        $region54: #{tpu_custom_call.1} parent=31 // pred_check_branch
          %481 = sbr.rel (%p479) target = $region56
        $region55: #{tpu_custom_call.1} parent=31 // pred_region
          %s483 = ssub.s32 16, 16
          %484 = vsyncadd %s448, %s483
          %s485 = smul.addr %s31, 16
          %s486 = scalar_lea.hbm %s5, %s485
          %s488 = sshll.u32 %s450, 4
          %s489 = int_to_ptr.vmem [resolvable:$true] %s488
          %491 = dma.vmem_to_hbm [thread:$0]  %s489, 16, %s486, %s448
        $region56: #{tpu_custom_call.1} parent=31 // pred_fallthru
          _
      $region32: #{tpu_custom_call.1} parent=5 // pred_fallthru
        _
      %p492 = scmp.le.s32.totalorder 2, %s22
      // Predicated region
      $region57: #{tpu_custom_call.1} parent=5 // pred_check
        %p493 = pneg %p492
      $region58: #{tpu_custom_call.1} parent=5 // pred_check_branch
        %495 = sbr.rel (%p493) target = $region60
      $region59: #{tpu_custom_call.1} parent=5 // pred_region
        %s496 = ssub.s32 %s22, 2
        // Predicated region
        $region61: #{tpu_custom_call.1} parent=59 // pred_check
          %p497 = pneg %p135
        $region62: #{tpu_custom_call.1} parent=59 // pred_check_branch
          %499 = sbr.rel (%p497) target = $region64
        $region63: #{tpu_custom_call.1} parent=59 // pred_region
          %s500 = sand.u32 %s120, 1
          %s501 = scalar_lea.sflag [#allocation4], %s500
          %s502 = sand.u32 %s120, 1
          %s503 = smul.addr %s502, 4
          %s504 = scalar_lea.vmem [#allocation7], %s503
          %505 = dma.done %s501, 64
        $region64: #{tpu_custom_call.1} parent=59 // pred_fallthru
          _
        // Predicated region
        $region65: #{tpu_custom_call.1} parent=59 // pred_check
          %p506 = pneg %p161
        $region66: #{tpu_custom_call.1} parent=59 // pred_check_branch
          %508 = sbr.rel (%p506) target = $region68
        $region67: #{tpu_custom_call.1} parent=59 // pred_region
          %s509 = sand.u32 %s28, 1
          %s510 = scalar_lea.sflag [#allocation9], %s509
          %s511 = sand.u32 %s146, 1
          %s512 = scalar_lea.vmem [#allocation8], %s511
          %513 = dma.done %s510, 16
        $region68: #{tpu_custom_call.1} parent=59 // pred_fallthru
          _
        // Predicated region
        $region69: #{tpu_custom_call.1} parent=59 // pred_check
          %p514 = pneg %p187
        $region70: #{tpu_custom_call.1} parent=59 // pred_check_branch
          %516 = sbr.rel (%p514) target = $region72
        $region71: #{tpu_custom_call.1} parent=59 // pred_region
          %s517 = sand.u32 %s28, 1
          %s518 = scalar_lea.sflag [#allocation9], %s517
          %s519 = sand.u32 %s172, 1
          %s520 = scalar_lea.vmem [#allocation10], %s519
          %521 = dma.done %s518, 16
        $region72: #{tpu_custom_call.1} parent=59 // pred_fallthru
          _
      $region60: #{tpu_custom_call.1} parent=5 // pred_fallthru
        _
    $region6: #{tpu_custom_call.1} parent=1 // loop_footer
      %s26 = sadd.s32 1, %s22
    $region7: #{tpu_custom_call.1} parent=1 // loop_footer_branch
      %21 = sbr.rel target = $region3
    $region8: #{tpu_custom_call.1} parent=1 // loop_exit
      _
    %522 = vsyncpa [#allocation3], 1
    %s523 = scalar_lea.sflag [#allocation3], 1
    %524 = vsyncpa %s523, 1
    %525 = vsyncpa [#allocation6], 1
    %526 = vsyncpa [#allocation4], 1
    %s527 = scalar_lea.sflag [#allocation4], 1
    %528 = vsyncpa %s527, 1
    %529 = vsyncpa [#allocation9], 1
    %s530 = scalar_lea.sflag [#allocation9], 1
    %531 = vsyncpa %s530, 1

</llo_original>
